<compile_context>
chip_gen: v6e
topology: v6e:2x2x1
jax: 0.10.0
libtpu: 0.0.40
codegen_flags: <defaults>
</compile_context>

<pallas_src>
import functools

import jax
import jax.numpy as jnp
import numpy as np
from jax.experimental import pallas as pl
from jax.experimental.pallas import tpu as pltpu

BN_EPS = 1e-5


# ---------------------------------------------------------------------------
# Fused kernel: conv(3x3, via one im2col matmul) -> BN(batch stats) -> sigmoid
# ---------------------------------------------------------------------------
def out_unit_kernel(p_ref, w_ref, g_ref, beta_ref, o_ref, sum_ref, ssq_ref,
                    *, inv_count):
    # p_ref   : (1, 9*Cin, H*W)  im2col patches for one batch element
    # w_ref   : (Cp, 9*Cin)      conv weights, channel-padded to Cp (mult of 8)
    # g_ref   : (Cp, 1)          BN gamma (padded rows are 0)
    # beta_ref: (Cp, 1)          BN beta  (padded rows are 0)
    # o_ref   : (N, Cp, H*W)     resident output block (constant block index)
    # sum_ref : (Cp, 1)  f32     per-channel running sum      (VMEM scratch)
    # ssq_ref : (Cp, 1)  f32     per-channel running sum-sq   (VMEM scratch)
    n = pl.program_id(0)

    @pl.when(n == 0)
    def _init():
        sum_ref[...] = jnp.zeros_like(sum_ref)
        ssq_ref[...] = jnp.zeros_like(ssq_ref)

    # 3x3 conv for this batch element as ONE lane-dense MXU matmul:
    #   (Cp, 9*Cin) @ (9*Cin, H*W) -> (Cp, H*W), H*W on the 128-lane axis.
    # HIGHEST precision -> full-f32 multi-pass MXU (bf16 passes would give
    # ~4e-3 relative error and fail the check against the f32 reference).
    # (Conv bias omitted: cancelled exactly by the BN mean subtraction below.)
    y = jnp.dot(w_ref[...], p_ref[0],
                preferred_element_type=jnp.float32,
                precision=jax.lax.Precision.HIGHEST)

    # Stash un-normalized conv output in the resident output block and
    # accumulate per-channel batch statistics in f32 (cancellation-safe at
    # these sizes; switch to Welford if N*H*W grows very large).
    o_ref[n] = y
    sum_ref[...] += jnp.sum(y, axis=1, keepdims=True)
    ssq_ref[...] += jnp.sum(y * y, axis=1, keepdims=True)

    @pl.when(n == pl.num_programs(0) - 1)
    def _finalize():
        mean = sum_ref[...] * inv_count                       # (Cp, 1)
        var = ssq_ref[...] * inv_count - mean * mean          # biased (train) var
        inv_std = jax.lax.rsqrt(var + BN_EPS)
        scale = g_ref[...] * inv_std                          # (Cp, 1)
        shift = beta_ref[...] - mean * scale                  # (Cp, 1)

        z = o_ref[...] * scale[None] + shift[None]            # (N, Cp, H*W)
        # sigmoid = 1 / (1 + exp(-z)); exp on EUP, exact f32 divide (the EUP
        # approximate reciprocal was the other accuracy leak).
        o_ref[...] = 1.0 / (1.0 + jnp.exp(-z))


# ---------------------------------------------------------------------------
# Wrapper (NCHW in / NCHW out, PyTorch parameter conventions)
# ---------------------------------------------------------------------------
def out_unit_forward(x_nchw, w_oihw, b, gamma, beta):
    """Forward pass of OutUnit. Input/output are NCHW float32, like PyTorch."""
    N, Cin, H, W = x_nchw.shape
    Cout = w_oihw.shape[0]
    HW = H * W
    K9 = 9 * Cin
    Cp = ((Cout + 7) // 8) * 8          # pad channels to a sublane multiple

    x = x_nchw.astype(jnp.float32)
    # Conv bias `b` is mathematically a no-op under train-mode BatchNorm
    # (per-channel constant removed by mean subtraction) -> not passed in.
    del b

    # Glue (tiny tensors): spatial pad + im2col in the wrapper, tap-major /
    # cin-minor ordering.  patches[n, tap*Cin + cin, h*W + w]
    xp = jnp.pad(x, ((0, 0), (0, 0), (1, 1), (1, 1)))          # (N,Cin,H+2,W+2)
    taps = [xp[:, :, dy:dy + H, dx:dx + W]
            for dy in range(3) for dx in range(3)]             # 9 x (N,Cin,H,W)
    patches = jnp.stack(taps, axis=1).reshape(N, K9, HW)       # (N, 9*Cin, H*W)

    # Weights: OIHW -> (Cout, 9*Cin) matching the im2col ordering, then pad
    # channel rows to Cp.  gamma/beta padded with 0 (padded rows stay finite:
    # var=0 -> yhat=0 -> gamma*0 + 0 = 0 -> sigmoid = 0.5, sliced off below).
    w2 = jnp.transpose(w_oihw, (0, 2, 3, 1)).reshape(Cout, K9).astype(jnp.float32)
    w2p = jnp.pad(w2, ((0, Cp - Cout), (0, 0)))                # (Cp, 9*Cin)
    gamma_p = jnp.pad(gamma.astype(jnp.float32), (0, Cp - Cout)).reshape(Cp, 1)
    beta_p = jnp.pad(beta.astype(jnp.float32), (0, Cp - Cout)).reshape(Cp, 1)

    kernel = functools.partial(out_unit_kernel, inv_count=1.0 / float(N * HW))

    out = pl.pallas_call(
        kernel,
        out_shape=jax.ShapeDtypeStruct((N, Cp, HW), jnp.float32),
        grid_spec=pltpu.PrefetchScalarGridSpec(
            num_scalar_prefetch=0,
            grid=(N,),
            in_specs=[
                pl.BlockSpec((1, K9, HW), lambda n: (n, 0, 0)),   # im2col patches
                pl.BlockSpec((Cp, K9), lambda n: (0, 0)),         # conv weights
                pl.BlockSpec((Cp, 1), lambda n: (0, 0)),          # gamma
                pl.BlockSpec((Cp, 1), lambda n: (0, 0)),          # beta
            ],
            # Constant block index -> output stays resident in VMEM across the
            # whole grid and is written back to HBM exactly once at the end.
            out_specs=pl.BlockSpec((N, Cp, HW), lambda n: (0, 0, 0)),
            scratch_shapes=[
                pltpu.VMEM((Cp, 1), jnp.float32),   # per-channel sum
                pltpu.VMEM((Cp, 1), jnp.float32),   # per-channel sum of squares
            ],
        ),
        compiler_params=pltpu.CompilerParams(
            dimension_semantics=("arbitrary",),     # sequential: BN accumulation
        ),
    )(patches, w2p, gamma_p, beta_p)

    # (N, Cp, H*W) -> drop channel padding -> NCHW (pure reshape, no transpose).
    return out[:, :Cout, :].reshape(N, Cout, H, W)


# ---------------------------------------------------------------------------
# Pure-JAX reference (PyTorch semantics: conv + bias, train-mode BN, sigmoid),
# evaluated at full f32 precision to mirror PyTorch float32 arithmetic.
# ---------------------------------------------------------------------------
def out_unit_reference(x_nchw, w_oihw, b, gamma, beta):
    y = jax.lax.conv_general_dilated(
        x_nchw, w_oihw, window_strides=(1, 1), padding=((1, 1), (1, 1)),
        dimension_numbers=("NCHW", "OIHW", "NCHW"),
        precision=jax.lax.Precision.HIGHEST,
    )
    y = y + b[None, :, None, None]
    mean = jnp.mean(y, axis=(0, 2, 3), keepdims=True)
    var = jnp.mean(jnp.square(y - mean), axis=(0, 2, 3), keepdims=True)
    yhat = (y - mean) / jnp.sqrt(var + BN_EPS)
    out = yhat * gamma[None, :, None, None] + beta[None, :, None, None]
    return 1.0 / (1.0 + jnp.exp(-out))


if __name__ == "__main__":
    # Small, deterministic synthetic setup (matches the module's forward).
    N, Cin, Cout, H, W = 2, 4, 6, 16, 16

    key = jax.random.PRNGKey(0)
    kx, kw, kb = jax.random.split(key, 3)
    x = jax.random.normal(kx, (N, Cin, H, W), dtype=jnp.float32)
    # Conv2d params (deterministic synthetic init, PyTorch shape conventions).
    w = jax.random.normal(kw, (Cout, Cin, 3, 3), dtype=jnp.float32) * 0.1
    b = jax.random.normal(kb, (Cout,), dtype=jnp.float32) * 0.1
    # BatchNorm2d params at __init__: weight=1, bias=0.
    gamma = jnp.ones((Cout,), dtype=jnp.float32)
    beta = jnp.zeros((Cout,), dtype=jnp.float32)

    out = jax.block_until_ready(out_unit_forward(x, w, b, gamma, beta))
    ref = jax.block_until_ready(out_unit_reference(x, w, b, gamma, beta))

    # Full-f32 conv + exact sigmoid on both sides -> agreement well inside this.
    np.testing.assert_allclose(np.asarray(out), np.asarray(ref),
                               rtol=1e-3, atol=1e-4)

    print("KERNEL_OK")
</pallas_src>

<mosaic_0001>
module attributes {stable_mosaic.version = 11 : i64} {
  func.func @out_unit_kernel(%arg0: i32, %arg1: memref<1x36x256xf32, #tpu.memory_space<vmem>>, %arg2: memref<8x36xf32, #tpu.memory_space<vmem>>, %arg3: memref<8x1xf32, #tpu.memory_space<vmem>>, %arg4: memref<8x1xf32, #tpu.memory_space<vmem>>, %arg5: memref<2x8x256xf32, #tpu.memory_space<vmem>>, %arg6: memref<8x1xf32, #tpu.memory_space<vmem>>, %arg7: memref<8x1xf32, #tpu.memory_space<vmem>>) attributes {dimension_semantics = [#tpu.dimension_semantics<arbitrary>], iteration_bounds = array<i64: 2>, scalar_prefetch = 0 : i64, scratch_operands = 2 : i64, tpu.core_type = #tpu.core_type<tc>, window_params = [{transform_indices = @transform_0, window_bounds = array<i64: 1, 36, 256>}, {pipeline_mode = #tpu.pipeline_mode<synchronous>, transform_indices = @transform_1, window_bounds = array<i64: 8, 36>}, {pipeline_mode = #tpu.pipeline_mode<synchronous>, transform_indices = @transform_2, window_bounds = array<i64: 8, 1>}, {pipeline_mode = #tpu.pipeline_mode<synchronous>, transform_indices = @transform_3, window_bounds = array<i64: 8, 1>}, {pipeline_mode = #tpu.pipeline_mode<synchronous>, transform_indices = @transform_4, window_bounds = array<i64: 2, 8, 256>}]} {
    %c0_i32 = arith.constant 0 : i32
    %0 = arith.cmpi eq, %arg0, %c0_i32 : i32
    %1 = arith.extui %0 : i1 to i32
    %c0_i32_0 = arith.constant 0 : i32
    %2 = arith.cmpi ne, %1, %c0_i32_0 : i32
    scf.if %2 {
      %cst_18 = arith.constant 0.000000e+00 : f32
      %25 = vector.broadcast %cst_18 : f32 to vector<8x1xf32>
      %c0_19 = arith.constant 0 : index
      %c0_20 = arith.constant 0 : index
      %26 = vector.load %arg6[%c0_19, %c0_20] : memref<8x1xf32, #tpu.memory_space<vmem>>, vector<8x1xf32>
      tpu.vector_store %arg6[%c0_19, %c0_20], %25 {strides = array<i32>} : memref<8x1xf32, #tpu.memory_space<vmem>>, vector<8x1xf32>,
      %cst_21 = arith.constant 0.000000e+00 : f32
      %27 = vector.broadcast %cst_21 : f32 to vector<8x1xf32>
      %c0_22 = arith.constant 0 : index
      %c0_23 = arith.constant 0 : index
      %28 = vector.load %arg7[%c0_22, %c0_23] : memref<8x1xf32, #tpu.memory_space<vmem>>, vector<8x1xf32>
      tpu.vector_store %arg7[%c0_22, %c0_23], %27 {strides = array<i32>} : memref<8x1xf32, #tpu.memory_space<vmem>>, vector<8x1xf32>,
    } else {
    }
    %c0 = arith.constant 0 : index
    %c0_1 = arith.constant 0 : index
    %3 = vector.load %arg2[%c0, %c0_1] : memref<8x36xf32, #tpu.memory_space<vmem>>, vector<8x36xf32>
    %c0_2 = arith.constant 0 : index
    %c0_3 = arith.constant 0 : index
    %c0_4 = arith.constant 0 : index
    %4 = vector.load %arg1[%c0_2, %c0_3, %c0_4] : memref<1x36x256xf32, #tpu.memory_space<vmem>>, vector<1x36x256xf32>
    %5 = vector.shape_cast %4 : vector<1x36x256xf32> to vector<36x256xf32>
    %cst = arith.constant dense<0.000000e+00> : vector<8x256xf32>
    %6 = tpu.matmul %3, %5, %cst {dimension_numbers = #tpu.dot_dimension_numbers<[1], [0], [0], [1], [0, 0, 1, 1], [], []>, precision = #tpu.contract_precision<fp32>} : vector<8x36xf32>, vector<36x256xf32>, vector<8x256xf32> -> vector<8x256xf32>
    %7 = arith.index_cast %arg0 : i32 to index
    %c0_5 = arith.constant 0 : index
    %c0_6 = arith.constant 0 : index
    %8 = vector.load %arg5[%7, %c0_5, %c0_6] : memref<2x8x256xf32, #tpu.memory_space<vmem>>, vector<1x8x256xf32>
    %9 = vector.shape_cast %8 : vector<1x8x256xf32> to vector<8x256xf32>
    %10 = vector.shape_cast %6 : vector<8x256xf32> to vector<1x8x256xf32>
    tpu.vector_store %arg5[%7, %c0_5, %c0_6], %10 {strides = array<i32>} : memref<2x8x256xf32, #tpu.memory_space<vmem>>, vector<1x8x256xf32>,
    %c0_7 = arith.constant 0 : index
    %c0_8 = arith.constant 0 : index
    %11 = vector.load %arg6[%c0_7, %c0_8] : memref<8x1xf32, #tpu.memory_space<vmem>>, vector<8x1xf32>
    %cst_9 = arith.constant dense<0.000000e+00> : vector<8xf32>
    %12 = vector.multi_reduction <add>, %6, %cst_9 [1] : vector<8x256xf32> to vector<8xf32>
    %13 = vector.shape_cast %12 : vector<8xf32> to vector<8x1xf32>
    %14 = arith.addf %11, %13 : vector<8x1xf32>
    %c0_10 = arith.constant 0 : index
    %c0_11 = arith.constant 0 : index
    %15 = vector.load %arg6[%c0_10, %c0_11] : memref<8x1xf32, #tpu.memory_space<vmem>>, vector<8x1xf32>
    tpu.vector_store %arg6[%c0_10, %c0_11], %14 {strides = array<i32>} : memref<8x1xf32, #tpu.memory_space<vmem>>, vector<8x1xf32>,
    %c0_12 = arith.constant 0 : index
    %c0_13 = arith.constant 0 : index
    %16 = vector.load %arg7[%c0_12, %c0_13] : memref<8x1xf32, #tpu.memory_space<vmem>>, vector<8x1xf32>
    %17 = arith.mulf %6, %6 : vector<8x256xf32>
    %cst_14 = arith.constant dense<0.000000e+00> : vector<8xf32>
    %18 = vector.multi_reduction <add>, %17, %cst_14 [1] : vector<8x256xf32> to vector<8xf32>
    %19 = vector.shape_cast %18 : vector<8xf32> to vector<8x1xf32>
    %20 = arith.addf %16, %19 : vector<8x1xf32>
    %c0_15 = arith.constant 0 : index
    %c0_16 = arith.constant 0 : index
    %21 = vector.load %arg7[%c0_15, %c0_16] : memref<8x1xf32, #tpu.memory_space<vmem>>, vector<8x1xf32>
    tpu.vector_store %arg7[%c0_15, %c0_16], %20 {strides = array<i32>} : memref<8x1xf32, #tpu.memory_space<vmem>>, vector<8x1xf32>,
    %c1_i32 = arith.constant 1 : i32
    %22 = arith.cmpi eq, %arg0, %c1_i32 : i32
    %23 = arith.extui %22 : i1 to i32
    %c0_i32_17 = arith.constant 0 : i32
    %24 = arith.cmpi ne, %23, %c0_i32_17 : i32
    scf.if %24 {
      %c0_18 = arith.constant 0 : index
      %c0_19 = arith.constant 0 : index
      %25 = vector.load %arg6[%c0_18, %c0_19] : memref<8x1xf32, #tpu.memory_space<vmem>>, vector<8x1xf32>
      %cst_20 = arith.constant 0.001953125 : f32
      %26 = vector.broadcast %cst_20 : f32 to vector<8x1xf32>
      %27 = arith.mulf %25, %26 : vector<8x1xf32>
      %c0_21 = arith.constant 0 : index
      %c0_22 = arith.constant 0 : index
      %28 = vector.load %arg7[%c0_21, %c0_22] : memref<8x1xf32, #tpu.memory_space<vmem>>, vector<8x1xf32>
      %cst_23 = arith.constant 0.001953125 : f32
      %29 = vector.broadcast %cst_23 : f32 to vector<8x1xf32>
      %30 = arith.mulf %28, %29 : vector<8x1xf32>
      %31 = arith.mulf %27, %27 : vector<8x1xf32>
      %32 = arith.subf %30, %31 : vector<8x1xf32>
      %cst_24 = arith.constant 9.99999974E-6 : f32
      %33 = vector.broadcast %cst_24 : f32 to vector<8x1xf32>
      %34 = arith.addf %32, %33 : vector<8x1xf32>
      %35 = math.rsqrt %34 : vector<8x1xf32>
      %c0_25 = arith.constant 0 : index
      %c0_26 = arith.constant 0 : index
      %36 = vector.load %arg3[%c0_25, %c0_26] : memref<8x1xf32, #tpu.memory_space<vmem>>, vector<8x1xf32>
      %37 = arith.mulf %36, %35 : vector<8x1xf32>
      %c0_27 = arith.constant 0 : index
      %c0_28 = arith.constant 0 : index
      %38 = vector.load %arg4[%c0_27, %c0_28] : memref<8x1xf32, #tpu.memory_space<vmem>>, vector<8x1xf32>
      %39 = arith.mulf %27, %37 : vector<8x1xf32>
      %40 = arith.subf %38, %39 : vector<8x1xf32>
      %c0_29 = arith.constant 0 : index
      %c0_30 = arith.constant 0 : index
      %c0_31 = arith.constant 0 : index
      %41 = vector.load %arg5[%c0_29, %c0_30, %c0_31] : memref<2x8x256xf32, #tpu.memory_space<vmem>>, vector<2x8x256xf32>
      %42 = vector.shape_cast %37 : vector<8x1xf32> to vector<1x8x1xf32>
      %43 = vector.broadcast %42 : vector<1x8x1xf32> to vector<2x8x256xf32>
      %44 = arith.mulf %41, %43 : vector<2x8x256xf32>
      %45 = vector.shape_cast %40 : vector<8x1xf32> to vector<1x8x1xf32>
      %46 = vector.broadcast %45 : vector<1x8x1xf32> to vector<2x8x256xf32>
      %47 = arith.addf %44, %46 : vector<2x8x256xf32>
      %cst_32 = arith.constant 0.000000e+00 : f32
      %48 = vector.broadcast %cst_32 : f32 to vector<2x8x256xf32>
      %49 = arith.subf %48, %47 : vector<2x8x256xf32>
      %50 = math.exp %49 : vector<2x8x256xf32>
      %cst_33 = arith.constant 1.000000e+00 : f32
      %51 = vector.broadcast %cst_33 : f32 to vector<2x8x256xf32>
      %52 = arith.addf %51, %50 : vector<2x8x256xf32>
      %cst_34 = arith.constant 1.000000e+00 : f32
      %53 = vector.broadcast %cst_34 : f32 to vector<2x8x256xf32>
      %54 = arith.divf %53, %52 : vector<2x8x256xf32>
      %c0_35 = arith.constant 0 : index
      %c0_36 = arith.constant 0 : index
      %c0_37 = arith.constant 0 : index
      %55 = vector.load %arg5[%c0_35, %c0_36, %c0_37] : memref<2x8x256xf32, #tpu.memory_space<vmem>>, vector<2x8x256xf32>
      tpu.vector_store %arg5[%c0_35, %c0_36, %c0_37], %54 {strides = array<i32>} : memref<2x8x256xf32, #tpu.memory_space<vmem>>, vector<2x8x256xf32>,
    } else {
    }
    return
  }
  func.func @transform_0(%arg0: i32) -> (i32, i32, i32) {
    %c0_i32 = arith.constant 0 : i32
    %c0_i32_0 = arith.constant 0 : i32
    %c0_i32_1 = arith.constant 0 : i32
    return %arg0, %c0_i32, %c0_i32_0 : i32, i32, i32
  }
  func.func @transform_1(%arg0: i32) -> (i32, i32) {
    %c0_i32 = arith.constant 0 : i32
    %c0_i32_0 = arith.constant 0 : i32
    %c0_i32_1 = arith.constant 0 : i32
    return %c0_i32, %c0_i32_0 : i32, i32
  }
  func.func @transform_2(%arg0: i32) -> (i32, i32) {
    %c0_i32 = arith.constant 0 : i32
    %c0_i32_0 = arith.constant 0 : i32
    %c0_i32_1 = arith.constant 0 : i32
    return %c0_i32, %c0_i32_0 : i32, i32
  }
  func.func @transform_3(%arg0: i32) -> (i32, i32) {
    %c0_i32 = arith.constant 0 : i32
    %c0_i32_0 = arith.constant 0 : i32
    %c0_i32_1 = arith.constant 0 : i32
    return %c0_i32, %c0_i32_0 : i32, i32
  }
  func.func @transform_4(%arg0: i32) -> (i32, i32, i32) {
    %c0_i32 = arith.constant 0 : i32
    %c0_i32_0 = arith.constant 0 : i32
    %c0_i32_1 = arith.constant 0 : i32
    %c0_i32_2 = arith.constant 0 : i32
    return %c0_i32, %c0_i32_0, %c0_i32_1 : i32, i32, i32
  }
}

</mosaic_0001>

<llo_original>
// kernel: tpu_custom_call.1
$region0: #{tpu_custom_call.1}
  #allocation0 [shape = 'u32[]', space=smem, size = 0x4, offset = 0x4, fixed_abs, tag = 'smem constant byte address 0x4 - core index']
  #allocation1 [shape = 'u32[144,128]{1,0:T(1,128)}', space=vmem, size = 0x12000, scoped, tag = 'internal scratch']
  #allocation2 [shape = 'f32[8,1]{1,0:T(8,128)}', space=vmem, size = 0x1000, scoped, tag = 'scratch operand']
  #allocation3 [shape = 'f32[8,1]{1,0:T(8,128)}', space=vmem, size = 0x1000, scoped, tag = 'scratch operand']
  %s0 = inlined_call_operand.vmem [shape: f32[2,36,256], index: 0, kind: input, shape index: {}]
  %s1 = inlined_call_operand.vmem [shape: f32[8,36], index: 1, kind: input, shape index: {}]
  %s2 = inlined_call_operand.vmem [shape: f32[8,1], index: 2, kind: input, shape index: {}]
  %s3 = inlined_call_operand.vmem [shape: f32[8,1], index: 3, kind: input, shape index: {}]
  %s4 = inlined_call_operand.hbm [shape: f32[2,8,256], index: 4, kind: output, shape index: {}]
  %s5 = sld [smem:[#allocation0]]
  $region57: #{tpu_custom_call.1} parent=0
    _
  %s7 = ssub.s32 1, %s5
  %s8 = scalar_select 0, %s7, %s5
  $region1: #{tpu_custom_call.1} parent=0
    #allocation4 [shape = 'u8[16384]{0}', space=vmem, size = 0x4000, scoped, tag = 'output window, operand 0, single buffered']
    #allocation5 [shape = 's32[2]{0}', space=sflag, size = 0x8, scoped, tag = 'scoped memory for tpu_custom_call.1']
    %9 = vsyncpa [#allocation5], 0
    loop: start=0, step=1, limit=4
    $region2: #{tpu_custom_call.1} parent=1 // loop_pre_header
      _
    $region3: #{tpu_custom_call.1} parent=1 // loop_header
      %s11 = sphi 0, %s15
      %p12 = scmp.ge.s32.totalorder %s11, 4
      %s21 = sphi 0, %s23
      %s24 = sphi 0, %s21
      %s25 = sphi 0, %s24
      %s41 = sphi 0, %s25
      %s45 = sphi 0, %s45
      %s47 = sphi 0, %s45
      %s48 = sphi 0, %s47
      %s62 = sphi 0, %s48
      %s66 = sphi 0, %s66
      %s68 = sphi 0, %s66
      %s69 = sphi 0, %s68
      %s83 = sphi 0, %s69
      %s87 = sphi 0, %s87
      %s89 = sphi 0, %s87
      %s90 = sphi 0, %s89
      %s104 = sphi 0, %s90
      %s108 = sphi 0, %s108
      %s110 = sphi 0, %s108
      %s111 = sphi 0, %s110
      %s125 = sphi 0, %s111
    $region4: #{tpu_custom_call.1} parent=1 // loop_header_branch
      %14 = sbr.rel (%p12) target = $region8
    $region5: #{tpu_custom_call.1} parent=1 // loop_body
      %s16 = ssub.s32 %s11, 1
      %s17 = ssub.s32 %s11, 2
      %s18 = sadd.s32 %s11, 1
      %s19 = ssub.s32 %s11, %s18
      %p20 = scmp.eq.s32.totalorder %s19, 0
      %s22 = sadd.s32 %s21, 1
      %s23 = scalar_select %p20, %s21, %s22
      %p26 = pneg %p20
      %p27 = scmp.eq.s32.totalorder %s11, 1
      %p28 = por %p26, %p27
      %p29 = scmp.ne.s32.totalorder %s21, %s24
      %p30 = scmp.eq.s32.totalorder %s11, 0
      %p31 = por %p29, %p30
      %p32 = scmp.ne.s32.totalorder %s21, %s24
      %p33 = scmp.eq.s32.totalorder %s16, 1
      %p34 = por %p32, %p33
      %p35 = scmp.ne.s32.totalorder %s24, %s25
      %p36 = scmp.eq.s32.totalorder %s16, 0
      %p37 = por %p35, %p36
      %p38 = scmp.ne.s32.totalorder %s24, %s25
      %p39 = scmp.eq.s32.totalorder %s17, 1
      %p40 = por %p38, %p39
      %p42 = scmp.ne.s32.totalorder %s25, %s41
      %p43 = scmp.eq.s32.totalorder %s17, 0
      %p44 = por %p42, %p43
      %s46 = sadd.s32 %s45, 1
      %p49 = scmp.eq.s32.totalorder %s11, 1
      %p50 = scmp.ne.s32.totalorder %s45, %s47
      %p51 = scmp.eq.s32.totalorder %s11, 0
      %p52 = por %p50, %p51
      %p53 = scmp.ne.s32.totalorder %s45, %s47
      %p54 = scmp.eq.s32.totalorder %s16, 1
      %p55 = por %p53, %p54
      %p56 = scmp.ne.s32.totalorder %s47, %s48
      %p57 = scmp.eq.s32.totalorder %s16, 0
      %p58 = por %p56, %p57
      %p59 = scmp.ne.s32.totalorder %s47, %s48
      %p60 = scmp.eq.s32.totalorder %s17, 1
      %p61 = por %p59, %p60
      %p63 = scmp.ne.s32.totalorder %s48, %s62
      %p64 = scmp.eq.s32.totalorder %s17, 0
      %p65 = por %p63, %p64
      %s67 = sadd.s32 %s66, 1
      %p70 = scmp.eq.s32.totalorder %s11, 1
      %p71 = scmp.ne.s32.totalorder %s66, %s68
      %p72 = scmp.eq.s32.totalorder %s11, 0
      %p73 = por %p71, %p72
      %p74 = scmp.ne.s32.totalorder %s66, %s68
      %p75 = scmp.eq.s32.totalorder %s16, 1
      %p76 = por %p74, %p75
      %p77 = scmp.ne.s32.totalorder %s68, %s69
      %p78 = scmp.eq.s32.totalorder %s16, 0
      %p79 = por %p77, %p78
      %p80 = scmp.ne.s32.totalorder %s68, %s69
      %p81 = scmp.eq.s32.totalorder %s17, 1
      %p82 = por %p80, %p81
      %p84 = scmp.ne.s32.totalorder %s69, %s83
      %p85 = scmp.eq.s32.totalorder %s17, 0
      %p86 = por %p84, %p85
      %s88 = sadd.s32 %s87, 1
      %p91 = scmp.eq.s32.totalorder %s11, 1
      %p92 = scmp.ne.s32.totalorder %s87, %s89
      %p93 = scmp.eq.s32.totalorder %s11, 0
      %p94 = por %p92, %p93
      %p95 = scmp.ne.s32.totalorder %s87, %s89
      %p96 = scmp.eq.s32.totalorder %s16, 1
      %p97 = por %p95, %p96
      %p98 = scmp.ne.s32.totalorder %s89, %s90
      %p99 = scmp.eq.s32.totalorder %s16, 0
      %p100 = por %p98, %p99
      %p101 = scmp.ne.s32.totalorder %s89, %s90
      %p102 = scmp.eq.s32.totalorder %s17, 1
      %p103 = por %p101, %p102
      %p105 = scmp.ne.s32.totalorder %s90, %s104
      %p106 = scmp.eq.s32.totalorder %s17, 0
      %p107 = por %p105, %p106
      %s109 = sadd.s32 %s108, 1
      %p112 = scmp.eq.s32.totalorder %s11, 1
      %p113 = scmp.ne.s32.totalorder %s108, %s110
      %p114 = scmp.eq.s32.totalorder %s11, 0
      %p115 = por %p113, %p114
      %p116 = scmp.ne.s32.totalorder %s108, %s110
      %p117 = scmp.eq.s32.totalorder %s16, 1
      %p118 = por %p116, %p117
      %p119 = scmp.ne.s32.totalorder %s110, %s111
      %p120 = scmp.eq.s32.totalorder %s16, 0
      %p121 = por %p119, %p120
      %p122 = scmp.ne.s32.totalorder %s110, %s111
      %p123 = scmp.eq.s32.totalorder %s17, 1
      %p124 = por %p122, %p123
      %p126 = scmp.ne.s32.totalorder %s111, %s125
      %p127 = scmp.eq.s32.totalorder %s17, 0
      %p128 = por %p126, %p127
      %p129 = scmp.le.s32.totalorder 1, %s11
      %p130 = scmp.lt.s32.totalorder %s11, 3
      %p131 = pnand %p129, %p130
      %p132 = pneg %p131
      // Predicated region
      $region9: #{tpu_custom_call.1} parent=5 // pred_check
        _
      $region10: #{tpu_custom_call.1} parent=5 // pred_check_branch
        %134 = sbr.rel (%p131) target = $region12
      $region11: #{tpu_custom_call.1} parent=5 // pred_region
        %s135 = ssub.s32 %s11, 1
        // Predicated region
        $region13: #{tpu_custom_call.1} parent=11 // pred_check
          %p136 = pneg %p58
        $region14: #{tpu_custom_call.1} parent=11 // pred_check_branch
          %138 = sbr.rel (%p136) target = $region16
        $region15: #{tpu_custom_call.1} parent=11 // pred_region
          _
        $region16: #{tpu_custom_call.1} parent=11 // pred_fallthru
          _
        // Predicated region
        $region17: #{tpu_custom_call.1} parent=11 // pred_check
          %p139 = pneg %p79
        $region18: #{tpu_custom_call.1} parent=11 // pred_check_branch
          %141 = sbr.rel (%p139) target = $region20
        $region19: #{tpu_custom_call.1} parent=11 // pred_region
          _
        $region20: #{tpu_custom_call.1} parent=11 // pred_fallthru
          _
        // Predicated region
        $region21: #{tpu_custom_call.1} parent=11 // pred_check
          %p142 = pneg %p100
        $region22: #{tpu_custom_call.1} parent=11 // pred_check_branch
          %144 = sbr.rel (%p142) target = $region24
        $region23: #{tpu_custom_call.1} parent=11 // pred_region
          _
        $region24: #{tpu_custom_call.1} parent=11 // pred_fallthru
          _
      $region12: #{tpu_custom_call.1} parent=5 // pred_fallthru
        _
      %p145 = scmp.lt.s32.totalorder %s11, 2
      // Predicated region
      $region25: #{tpu_custom_call.1} parent=5 // pred_check
        %p146 = pneg %p145
      $region26: #{tpu_custom_call.1} parent=5 // pred_check_branch
        %148 = sbr.rel (%p146) target = $region28
      $region27: #{tpu_custom_call.1} parent=5 // pred_region
        // Predicated region
        $region29: #{tpu_custom_call.1} parent=27 // pred_check
          %p149 = pneg %p31
        $region30: #{tpu_custom_call.1} parent=27 // pred_check_branch
          %151 = sbr.rel (%p149) target = $region32
        $region31: #{tpu_custom_call.1} parent=27 // pred_region
          %p152 = scmp.lt.s32.totalorder %s11, 1
          %s153 = scalar_select %p152, %s11, 1
          %s154 = smul.addr %s153, 10
          %s155 = smul.addr %s154, 8
          %s156 = scalar_lea.vmem %s0, %s155
        $region32: #{tpu_custom_call.1} parent=27 // pred_fallthru
          _
      $region28: #{tpu_custom_call.1} parent=5 // pred_fallthru
        _
      %p157 = scmp.le.s32.totalorder 1, %s11
      %p158 = scmp.lt.s32.totalorder %s11, 3
      %p159 = pnand %p157, %p158
      %p160 = pneg %p159
      // Predicated region
      $region33: #{tpu_custom_call.1} parent=5 // pred_check
        _
      $region34: #{tpu_custom_call.1} parent=5 // pred_check_branch
        %162 = sbr.rel (%p159) target = $region36
      $region35: #{tpu_custom_call.1} parent=5 // pred_region
        %s163 = ssub.s32 %s11, 1
        %p164 = scmp.lt.s32.totalorder %s16, 1
        %s165 = scalar_select %p164, %s16, 1
        %s166 = smul.addr %s165, 10
        %s167 = smul.addr %s166, 8
        %s168 = scalar_lea.vmem %s0, %s167
        %p169 = pneg %p37
        %p170 = pneg %p34
        %p171 = pneg %p58
        %p172 = pneg %p55
        %p173 = pneg %p79
        %p174 = pneg %p76
        %p175 = pneg %p100
        %p176 = pneg %p97
        %p177 = pneg %p121
        %p178 = pneg %p118
        %p179 = scmp.lt.s32.totalorder %s16, 1
        %s180 = scalar_select %p179, %s16, 1
        %s181 = smul.addr %s180, 10
        %s182 = smul.addr %s181, 8
        %s183 = scalar_lea.vmem %s0, %s182
        %p184 = scmp.eq.s32.totalorder %s16, 0
        // Predicated region
        $region37: #{tpu_custom_call.1} parent=35 // pred_check
          %p185 = pneg %p184
        $region38: #{tpu_custom_call.1} parent=35 // pred_check_branch
          %187 = sbr.rel (%p185) target = $region40
        $region39: #{tpu_custom_call.1} parent=35 // pred_region
          %vm188 = vcmask 7168
          %189 = vst.msk [vmem:[#allocation2] sm:$0xff] %vm188, 0.0
          %190 = vst.msk [vmem:[#allocation3] sm:$0xff] %vm188, 0.0
        $region40: #{tpu_custom_call.1} parent=35 // pred_fallthru
          _
        %v191 = vld [vmem:[%s1] sm:$0xff]
        %v192 = vld [vmem:[%s183] sm:$0xff]
        %v193 = vld [vmem:[%s183 + $0x8] sm:$0xff]
        %v194 = vld [vmem:[%s183 + $0x10] sm:$0xff]
        %v195 = vld [vmem:[%s183 + $0x18] sm:$0xff]
        %v196 = vld [vmem:[%s183 + $0x20] sm:$0xff]
        %v197 = vld [vmem:[%s183 + $0x28] sm:$0xff]
        %v198 = vld [vmem:[%s183 + $0x30] sm:$0xff]
        %v199 = vld [vmem:[%s183 + $0x38] sm:$0xff]
        %v200 = vld [vmem:[%s183 + $0x40] sm:$0xf]
        %v201 = vld [vmem:[%s183 + $0x48] sm:$0xf]
        %vm202 = vcmask 293888
        %v204 = vsel %vm202, %v191, 0
        %vm206 = vcmask 1043456
        %v208 = vsel %vm206, %v200, 0
        %v211 = vsel %vm206, %v201, 0
        %213 = vmatprep.subr.mxu0 0.0
        %214 = vmatpush1.msra.mxu0 0.0
        %215 = vmatprep.subr.mxu0 0.0
        %216 = vmatpush1.msra.mxu0 0.0
        %217 = vmatprep.subr.mxu0 0.0
        %218 = vmatpush1.msra.mxu0 0.0
        %219 = vmatprep.subr.mxu0 0.0
        %220 = vmatpush1.msra.mxu0 0.0
        %221 = vmatprep.subr.mxu0 0.0
        %222 = vmatpush1.msra.mxu0 0.0
        %223 = vmatprep.subr.mxu0 0.0
        %224 = vmatpush1.msra.mxu0 0.0
        %225 = vmatprep.subr.mxu0 0.0
        %226 = vmatpush1.msra.mxu0 0.0
        %227 = vmatprep.subr.mxu0 0.0
        %228 = vmatpush1.msra.mxu0 0.0
        %229 = vmatprep.subr.mxu0 0.0
        %230 = vmatpush1.msra.mxu0 0.0
        %231 = vmatprep.subr.mxu0 0.0
        %232 = vmatpush1.msra.mxu0 0.0
        %233 = vmatprep.subr.mxu0 0.0
        %234 = vmatpush1.msra.mxu0 0.0
        %v235 = vand.u32 %v211, 4294901760
        %236 = vmatprep.subr.mxu0 %v235
        %v237 = vand.u32 %v208, 4294901760
        %238 = vmatpush1.msra.mxu0 %v237
        %v239 = vand.u32 %v199, 4294901760
        %240 = vmatprep.subr.mxu0 %v239
        %v241 = vand.u32 %v198, 4294901760
        %242 = vmatpush1.msra.mxu0 %v241
        %v243 = vand.u32 %v197, 4294901760
        %244 = vmatprep.subr.mxu0 %v243
        %v245 = vand.u32 %v196, 4294901760
        %246 = vmatpush1.msra.mxu0 %v245
        %v247 = vand.u32 %v195, 4294901760
        %248 = vmatprep.subr.mxu0 %v247
        %v249 = vand.u32 %v194, 4294901760
        %250 = vmatpush1.msra.mxu0 %v249
        %v251 = vand.u32 %v193, 4294901760
        %252 = vmatprep.subr.mxu0 %v251
        %v253 = vand.u32 %v192, 4294901760
        %254 = vmatpush1.msra.mxu0 %v253
        %255 = vmatprep.subr.mxu0 0.0
        %256 = vmatpush2.msra.mxu0 0.0
        %257 = vmatprep.subr.mxu0 0.0
        %258 = vmatpush2.msra.mxu0 0.0
        %259 = vmatprep.subr.mxu0 0.0
        %260 = vmatpush2.msra.mxu0 0.0
        %261 = vmatprep.subr.mxu0 0.0
        %262 = vmatpush2.msra.mxu0 0.0
        %263 = vmatprep.subr.mxu0 0.0
        %264 = vmatpush2.msra.mxu0 0.0
        %265 = vmatprep.subr.mxu0 0.0
        %266 = vmatpush2.msra.mxu0 0.0
        %267 = vmatprep.subr.mxu0 0.0
        %268 = vmatpush2.msra.mxu0 0.0
        %269 = vmatprep.subr.mxu0 0.0
        %270 = vmatpush2.msra.mxu0 0.0
        %271 = vmatprep.subr.mxu0 0.0
        %272 = vmatpush2.msra.mxu0 0.0
        %273 = vmatprep.subr.mxu0 0.0
        %274 = vmatpush2.msra.mxu0 0.0
        %275 = vmatprep.subr.mxu0 0.0
        %276 = vmatpush2.msra.mxu0 0.0
        %277 = vmatprep.subr.mxu0 0.0
        %278 = vmatpush2.msra.mxu0 0.0
        %279 = vmatprep.subr.mxu0 0.0
        %280 = vmatpush2.msra.mxu0 0.0
        %281 = vmatprep.subr.mxu0 0.0
        %282 = vmatpush2.msra.mxu0 0.0
        %283 = vmatprep.subr.mxu0 0.0
        %284 = vmatpush2.msra.mxu0 0.0
        %285 = vmatprep.subr.mxu0 0.0
        %286 = vmatpush2.msra.mxu0 0.0
        %287 = vmatprep.mubr.f32.mxu0 0.0
        %v288 = vand.u32 %v204, 4294901760
        %v289 = vsub.f32 %v204, %v288
        %v290 = vand.u32 %v289, 4294901760
        %v291 = vsub.f32 %v289, %v290
        %v292 = vand.u32 %v291, 4294901760
        %293 = vmatmul.mubr.f32.gmra.mxu0 %v292
        %v294 = vpop.f32.mrf.mxu0
        %v295 = vadd.f32 0.0, %v294
        %v296 = vpop.f32.mrf.mxu0
        %v297 = vadd.f32 0.0, %v296
        %298 = vdwg.mxu0
        %299 = vmatprep.subr.mxu0 0.0
        %300 = vmatpush1.msra.mxu0 0.0
        %301 = vmatprep.subr.mxu0 0.0
        %302 = vmatpush1.msra.mxu0 0.0
        %303 = vmatprep.subr.mxu0 0.0
        %304 = vmatpush1.msra.mxu0 0.0
        %305 = vmatprep.subr.mxu0 0.0
        %306 = vmatpush1.msra.mxu0 0.0
        %307 = vmatprep.subr.mxu0 0.0
        %308 = vmatpush1.msra.mxu0 0.0
        %309 = vmatprep.subr.mxu0 0.0
        %310 = vmatpush1.msra.mxu0 0.0
        %311 = vmatprep.subr.mxu0 0.0
        %312 = vmatpush1.msra.mxu0 0.0
        %313 = vmatprep.subr.mxu0 0.0
        %314 = vmatpush1.msra.mxu0 0.0
        %315 = vmatprep.subr.mxu0 0.0
        %316 = vmatpush1.msra.mxu0 0.0
        %317 = vmatprep.subr.mxu0 0.0
        %318 = vmatpush1.msra.mxu0 0.0
        %319 = vmatprep.subr.mxu0 0.0
        %320 = vmatpush1.msra.mxu0 0.0
        %v321 = vand.u32 %v211, 4294901760
        %v322 = vsub.f32 %v211, %v321
        %v323 = vand.u32 %v322, 4294901760
        %v324 = vsub.f32 %v322, %v323
        %v325 = vand.u32 %v324, 4294901760
        %326 = vmatprep.subr.mxu0 %v325
        %v327 = vand.u32 %v208, 4294901760
        %v328 = vsub.f32 %v208, %v327
        %v329 = vand.u32 %v328, 4294901760
        %v330 = vsub.f32 %v328, %v329
        %v331 = vand.u32 %v330, 4294901760
        %332 = vmatpush1.msra.mxu0 %v331
        %v333 = vand.u32 %v199, 4294901760
        %v334 = vsub.f32 %v199, %v333
        %v335 = vand.u32 %v334, 4294901760
        %v336 = vsub.f32 %v334, %v335
        %v337 = vand.u32 %v336, 4294901760
        %338 = vmatprep.subr.mxu0 %v337
        %v339 = vand.u32 %v198, 4294901760
        %v340 = vsub.f32 %v198, %v339
        %v341 = vand.u32 %v340, 4294901760
        %v342 = vsub.f32 %v340, %v341
        %v343 = vand.u32 %v342, 4294901760
        %344 = vmatpush1.msra.mxu0 %v343
        %v345 = vand.u32 %v197, 4294901760
        %v346 = vsub.f32 %v197, %v345
        %v347 = vand.u32 %v346, 4294901760
        %v348 = vsub.f32 %v346, %v347
        %v349 = vand.u32 %v348, 4294901760
        %350 = vmatprep.subr.mxu0 %v349
        %v351 = vand.u32 %v196, 4294901760
        %v352 = vsub.f32 %v196, %v351
        %v353 = vand.u32 %v352, 4294901760
        %v354 = vsub.f32 %v352, %v353
        %v355 = vand.u32 %v354, 4294901760
        %356 = vmatpush1.msra.mxu0 %v355
        %v357 = vand.u32 %v195, 4294901760
        %v358 = vsub.f32 %v195, %v357
        %v359 = vand.u32 %v358, 4294901760
        %v360 = vsub.f32 %v358, %v359
        %v361 = vand.u32 %v360, 4294901760
        %362 = vmatprep.subr.mxu0 %v361
        %v363 = vand.u32 %v194, 4294901760
        %v364 = vsub.f32 %v194, %v363
        %v365 = vand.u32 %v364, 4294901760
        %v366 = vsub.f32 %v364, %v365
        %v367 = vand.u32 %v366, 4294901760
        %368 = vmatpush1.msra.mxu0 %v367
        %v369 = vand.u32 %v193, 4294901760
        %v370 = vsub.f32 %v193, %v369
        %v371 = vand.u32 %v370, 4294901760
        %v372 = vsub.f32 %v370, %v371
        %v373 = vand.u32 %v372, 4294901760
        %374 = vmatprep.subr.mxu0 %v373
        %v375 = vand.u32 %v192, 4294901760
        %v376 = vsub.f32 %v192, %v375
        %v377 = vand.u32 %v376, 4294901760
        %v378 = vsub.f32 %v376, %v377
        %v379 = vand.u32 %v378, 4294901760
        %380 = vmatpush1.msra.mxu0 %v379
        %381 = vmatprep.subr.mxu0 0.0
        %382 = vmatpush2.msra.mxu0 0.0
        %383 = vmatprep.subr.mxu0 0.0
        %384 = vmatpush2.msra.mxu0 0.0
        %385 = vmatprep.subr.mxu0 0.0
        %386 = vmatpush2.msra.mxu0 0.0
        %387 = vmatprep.subr.mxu0 0.0
        %388 = vmatpush2.msra.mxu0 0.0
        %389 = vmatprep.subr.mxu0 0.0
        %390 = vmatpush2.msra.mxu0 0.0
        %391 = vmatprep.subr.mxu0 0.0
        %392 = vmatpush2.msra.mxu0 0.0
        %393 = vmatprep.subr.mxu0 0.0
        %394 = vmatpush2.msra.mxu0 0.0
        %395 = vmatprep.subr.mxu0 0.0
        %396 = vmatpush2.msra.mxu0 0.0
        %397 = vmatprep.subr.mxu0 0.0
        %398 = vmatpush2.msra.mxu0 0.0
        %399 = vmatprep.subr.mxu0 0.0
        %400 = vmatpush2.msra.mxu0 0.0
        %401 = vmatprep.subr.mxu0 0.0
        %402 = vmatpush2.msra.mxu0 0.0
        %403 = vmatprep.subr.mxu0 0.0
        %404 = vmatpush2.msra.mxu0 0.0
        %405 = vmatprep.subr.mxu0 0.0
        %406 = vmatpush2.msra.mxu0 0.0
        %407 = vmatprep.subr.mxu0 0.0
        %408 = vmatpush2.msra.mxu0 0.0
        %409 = vmatprep.subr.mxu0 0.0
        %410 = vmatpush2.msra.mxu0 0.0
        %411 = vmatprep.subr.mxu0 0.0
        %412 = vmatpush2.msra.mxu0 0.0
        %413 = vmatprep.mubr.f32.mxu0 0.0
        %v414 = vand.u32 %v204, 4294901760
        %415 = vmatmul.mubr.f32.gmra.mxu0 %v414
        %v416 = vpop.f32.mrf.mxu0
        %v417 = vadd.f32 %v295, %v416
        %v418 = vpop.f32.mrf.mxu0
        %v419 = vadd.f32 %v297, %v418
        %420 = vdwg.mxu0
        %421 = vmatprep.subr.mxu0 0.0
        %422 = vmatpush1.msra.mxu0 0.0
        %423 = vmatprep.subr.mxu0 0.0
        %424 = vmatpush1.msra.mxu0 0.0
        %425 = vmatprep.subr.mxu0 0.0
        %426 = vmatpush1.msra.mxu0 0.0
        %427 = vmatprep.subr.mxu0 0.0
        %428 = vmatpush1.msra.mxu0 0.0
        %429 = vmatprep.subr.mxu0 0.0
        %430 = vmatpush1.msra.mxu0 0.0
        %431 = vmatprep.subr.mxu0 0.0
        %432 = vmatpush1.msra.mxu0 0.0
        %433 = vmatprep.subr.mxu0 0.0
        %434 = vmatpush1.msra.mxu0 0.0
        %435 = vmatprep.subr.mxu0 0.0
        %436 = vmatpush1.msra.mxu0 0.0
        %437 = vmatprep.subr.mxu0 0.0
        %438 = vmatpush1.msra.mxu0 0.0
        %439 = vmatprep.subr.mxu0 0.0
        %440 = vmatpush1.msra.mxu0 0.0
        %441 = vmatprep.subr.mxu0 0.0
        %442 = vmatpush1.msra.mxu0 0.0
        %v443 = vand.u32 %v211, 4294901760
        %v444 = vsub.f32 %v211, %v443
        %445 = vmatprep.subr.mxu0 %v444
        %v446 = vand.u32 %v208, 4294901760
        %v447 = vsub.f32 %v208, %v446
        %448 = vmatpush1.msra.mxu0 %v447
        %v449 = vand.u32 %v199, 4294901760
        %v450 = vsub.f32 %v199, %v449
        %451 = vmatprep.subr.mxu0 %v450
        %v452 = vand.u32 %v198, 4294901760
        %v453 = vsub.f32 %v198, %v452
        %454 = vmatpush1.msra.mxu0 %v453
        %v455 = vand.u32 %v197, 4294901760
        %v456 = vsub.f32 %v197, %v455
        %457 = vmatprep.subr.mxu0 %v456
        %v458 = vand.u32 %v196, 4294901760
        %v459 = vsub.f32 %v196, %v458
        %460 = vmatpush1.msra.mxu0 %v459
        %v461 = vand.u32 %v195, 4294901760
        %v462 = vsub.f32 %v195, %v461
        %463 = vmatprep.subr.mxu0 %v462
        %v464 = vand.u32 %v194, 4294901760
        %v465 = vsub.f32 %v194, %v464
        %466 = vmatpush1.msra.mxu0 %v465
        %v467 = vand.u32 %v193, 4294901760
        %v468 = vsub.f32 %v193, %v467
        %469 = vmatprep.subr.mxu0 %v468
        %v470 = vand.u32 %v192, 4294901760
        %v471 = vsub.f32 %v192, %v470
        %472 = vmatpush1.msra.mxu0 %v471
        %473 = vmatprep.subr.mxu0 0.0
        %474 = vmatpush2.msra.mxu0 0.0
        %475 = vmatprep.subr.mxu0 0.0
        %476 = vmatpush2.msra.mxu0 0.0
        %477 = vmatprep.subr.mxu0 0.0
        %478 = vmatpush2.msra.mxu0 0.0
        %479 = vmatprep.subr.mxu0 0.0
        %480 = vmatpush2.msra.mxu0 0.0
        %481 = vmatprep.subr.mxu0 0.0
        %482 = vmatpush2.msra.mxu0 0.0
        %483 = vmatprep.subr.mxu0 0.0
        %484 = vmatpush2.msra.mxu0 0.0
        %485 = vmatprep.subr.mxu0 0.0
        %486 = vmatpush2.msra.mxu0 0.0
        %487 = vmatprep.subr.mxu0 0.0
        %488 = vmatpush2.msra.mxu0 0.0
        %489 = vmatprep.subr.mxu0 0.0
        %490 = vmatpush2.msra.mxu0 0.0
        %491 = vmatprep.subr.mxu0 0.0
        %492 = vmatpush2.msra.mxu0 0.0
        %493 = vmatprep.subr.mxu0 0.0
        %494 = vmatpush2.msra.mxu0 0.0
        %495 = vmatprep.subr.mxu0 0.0
        %496 = vmatpush2.msra.mxu0 0.0
        %497 = vmatprep.subr.mxu0 0.0
        %498 = vmatpush2.msra.mxu0 0.0
        %499 = vmatprep.subr.mxu0 0.0
        %500 = vmatpush2.msra.mxu0 0.0
        %501 = vmatprep.subr.mxu0 0.0
        %502 = vmatpush2.msra.mxu0 0.0
        %503 = vmatprep.subr.mxu0 0.0
        %504 = vmatpush2.msra.mxu0 0.0
        %505 = vmatprep.mubr.f32.mxu0 0.0
        %v506 = vand.u32 %v204, 4294901760
        %v507 = vsub.f32 %v204, %v506
        %508 = vmatmul.mubr.f32.gmra.mxu0 %v507
        %v509 = vpop.f32.mrf.mxu0
        %v510 = vadd.f32 %v417, %v509
        %v511 = vpop.f32.mrf.mxu0
        %v512 = vadd.f32 %v419, %v511
        %513 = vdwg.mxu0
        %514 = vmatprep.subr.mxu0 0.0
        %515 = vmatpush1.msra.mxu0 0.0
        %516 = vmatprep.subr.mxu0 0.0
        %517 = vmatpush1.msra.mxu0 0.0
        %518 = vmatprep.subr.mxu0 0.0
        %519 = vmatpush1.msra.mxu0 0.0
        %520 = vmatprep.subr.mxu0 0.0
        %521 = vmatpush1.msra.mxu0 0.0
        %522 = vmatprep.subr.mxu0 0.0
        %523 = vmatpush1.msra.mxu0 0.0
        %524 = vmatprep.subr.mxu0 0.0
        %525 = vmatpush1.msra.mxu0 0.0
        %526 = vmatprep.subr.mxu0 0.0
        %527 = vmatpush1.msra.mxu0 0.0
        %528 = vmatprep.subr.mxu0 0.0
        %529 = vmatpush1.msra.mxu0 0.0
        %530 = vmatprep.subr.mxu0 0.0
        %531 = vmatpush1.msra.mxu0 0.0
        %532 = vmatprep.subr.mxu0 0.0
        %533 = vmatpush1.msra.mxu0 0.0
        %534 = vmatprep.subr.mxu0 0.0
        %535 = vmatpush1.msra.mxu0 0.0
        %v536 = vand.u32 %v211, 4294901760
        %537 = vmatprep.subr.mxu0 %v536
        %v538 = vand.u32 %v208, 4294901760
        %539 = vmatpush1.msra.mxu0 %v538
        %v540 = vand.u32 %v199, 4294901760
        %541 = vmatprep.subr.mxu0 %v540
        %v542 = vand.u32 %v198, 4294901760
        %543 = vmatpush1.msra.mxu0 %v542
        %v544 = vand.u32 %v197, 4294901760
        %545 = vmatprep.subr.mxu0 %v544
        %v546 = vand.u32 %v196, 4294901760
        %547 = vmatpush1.msra.mxu0 %v546
        %v548 = vand.u32 %v195, 4294901760
        %549 = vmatprep.subr.mxu0 %v548
        %v550 = vand.u32 %v194, 4294901760
        %551 = vmatpush1.msra.mxu0 %v550
        %v552 = vand.u32 %v193, 4294901760
        %553 = vmatprep.subr.mxu0 %v552
        %v554 = vand.u32 %v192, 4294901760
        %555 = vmatpush1.msra.mxu0 %v554
        %556 = vmatprep.subr.mxu0 0.0
        %557 = vmatpush2.msra.mxu0 0.0
        %558 = vmatprep.subr.mxu0 0.0
        %559 = vmatpush2.msra.mxu0 0.0
        %560 = vmatprep.subr.mxu0 0.0
        %561 = vmatpush2.msra.mxu0 0.0
        %562 = vmatprep.subr.mxu0 0.0
        %563 = vmatpush2.msra.mxu0 0.0
        %564 = vmatprep.subr.mxu0 0.0
        %565 = vmatpush2.msra.mxu0 0.0
        %566 = vmatprep.subr.mxu0 0.0
        %567 = vmatpush2.msra.mxu0 0.0
        %568 = vmatprep.subr.mxu0 0.0
        %569 = vmatpush2.msra.mxu0 0.0
        %570 = vmatprep.subr.mxu0 0.0
        %571 = vmatpush2.msra.mxu0 0.0
        %572 = vmatprep.subr.mxu0 0.0
        %573 = vmatpush2.msra.mxu0 0.0
        %574 = vmatprep.subr.mxu0 0.0
        %575 = vmatpush2.msra.mxu0 0.0
        %576 = vmatprep.subr.mxu0 0.0
        %577 = vmatpush2.msra.mxu0 0.0
        %578 = vmatprep.subr.mxu0 0.0
        %579 = vmatpush2.msra.mxu0 0.0
        %580 = vmatprep.subr.mxu0 0.0
        %581 = vmatpush2.msra.mxu0 0.0
        %582 = vmatprep.subr.mxu0 0.0
        %583 = vmatpush2.msra.mxu0 0.0
        %584 = vmatprep.subr.mxu0 0.0
        %585 = vmatpush2.msra.mxu0 0.0
        %586 = vmatprep.subr.mxu0 0.0
        %587 = vmatpush2.msra.mxu0 0.0
        %588 = vmatprep.mubr.f32.mxu0 0.0
        %v589 = vand.u32 %v204, 4294901760
        %v590 = vsub.f32 %v204, %v589
        %v591 = vand.u32 %v590, 4294901760
        %592 = vmatmul.mubr.f32.gmra.mxu0 %v591
        %v593 = vpop.f32.mrf.mxu0
        %v594 = vadd.f32 %v510, %v593
        %v595 = vpop.f32.mrf.mxu0
        %v596 = vadd.f32 %v512, %v595
        %597 = vdwg.mxu0
        %598 = vmatprep.subr.mxu0 0.0
        %599 = vmatpush1.msra.mxu0 0.0
        %600 = vmatprep.subr.mxu0 0.0
        %601 = vmatpush1.msra.mxu0 0.0
        %602 = vmatprep.subr.mxu0 0.0
        %603 = vmatpush1.msra.mxu0 0.0
        %604 = vmatprep.subr.mxu0 0.0
        %605 = vmatpush1.msra.mxu0 0.0
        %606 = vmatprep.subr.mxu0 0.0
        %607 = vmatpush1.msra.mxu0 0.0
        %608 = vmatprep.subr.mxu0 0.0
        %609 = vmatpush1.msra.mxu0 0.0
        %610 = vmatprep.subr.mxu0 0.0
        %611 = vmatpush1.msra.mxu0 0.0
        %612 = vmatprep.subr.mxu0 0.0
        %613 = vmatpush1.msra.mxu0 0.0
        %614 = vmatprep.subr.mxu0 0.0
        %615 = vmatpush1.msra.mxu0 0.0
        %616 = vmatprep.subr.mxu0 0.0
        %617 = vmatpush1.msra.mxu0 0.0
        %618 = vmatprep.subr.mxu0 0.0
        %619 = vmatpush1.msra.mxu0 0.0
        %v620 = vand.u32 %v211, 4294901760
        %v621 = vsub.f32 %v211, %v620
        %v622 = vand.u32 %v621, 4294901760
        %623 = vmatprep.subr.mxu0 %v622
        %v624 = vand.u32 %v208, 4294901760
        %v625 = vsub.f32 %v208, %v624
        %v626 = vand.u32 %v625, 4294901760
        %627 = vmatpush1.msra.mxu0 %v626
        %v628 = vand.u32 %v199, 4294901760
        %v629 = vsub.f32 %v199, %v628
        %v630 = vand.u32 %v629, 4294901760
        %631 = vmatprep.subr.mxu0 %v630
        %v632 = vand.u32 %v198, 4294901760
        %v633 = vsub.f32 %v198, %v632
        %v634 = vand.u32 %v633, 4294901760
        %635 = vmatpush1.msra.mxu0 %v634
        %v636 = vand.u32 %v197, 4294901760
        %v637 = vsub.f32 %v197, %v636
        %v638 = vand.u32 %v637, 4294901760
        %639 = vmatprep.subr.mxu0 %v638
        %v640 = vand.u32 %v196, 4294901760
        %v641 = vsub.f32 %v196, %v640
        %v642 = vand.u32 %v641, 4294901760
        %643 = vmatpush1.msra.mxu0 %v642
        %v644 = vand.u32 %v195, 4294901760
        %v645 = vsub.f32 %v195, %v644
        %v646 = vand.u32 %v645, 4294901760
        %647 = vmatprep.subr.mxu0 %v646
        %v648 = vand.u32 %v194, 4294901760
        %v649 = vsub.f32 %v194, %v648
        %v650 = vand.u32 %v649, 4294901760
        %651 = vmatpush1.msra.mxu0 %v650
        %v652 = vand.u32 %v193, 4294901760
        %v653 = vsub.f32 %v193, %v652
        %v654 = vand.u32 %v653, 4294901760
        %655 = vmatprep.subr.mxu0 %v654
        %v656 = vand.u32 %v192, 4294901760
        %v657 = vsub.f32 %v192, %v656
        %v658 = vand.u32 %v657, 4294901760
        %659 = vmatpush1.msra.mxu0 %v658
        %660 = vmatprep.subr.mxu0 0.0
        %661 = vmatpush2.msra.mxu0 0.0
        %662 = vmatprep.subr.mxu0 0.0
        %663 = vmatpush2.msra.mxu0 0.0
        %664 = vmatprep.subr.mxu0 0.0
        %665 = vmatpush2.msra.mxu0 0.0
        %666 = vmatprep.subr.mxu0 0.0
        %667 = vmatpush2.msra.mxu0 0.0
        %668 = vmatprep.subr.mxu0 0.0
        %669 = vmatpush2.msra.mxu0 0.0
        %670 = vmatprep.subr.mxu0 0.0
        %671 = vmatpush2.msra.mxu0 0.0
        %672 = vmatprep.subr.mxu0 0.0
        %673 = vmatpush2.msra.mxu0 0.0
        %674 = vmatprep.subr.mxu0 0.0
        %675 = vmatpush2.msra.mxu0 0.0
        %676 = vmatprep.subr.mxu0 0.0
        %677 = vmatpush2.msra.mxu0 0.0
        %678 = vmatprep.subr.mxu0 0.0
        %679 = vmatpush2.msra.mxu0 0.0
        %680 = vmatprep.subr.mxu0 0.0
        %681 = vmatpush2.msra.mxu0 0.0
        %682 = vmatprep.subr.mxu0 0.0
        %683 = vmatpush2.msra.mxu0 0.0
        %684 = vmatprep.subr.mxu0 0.0
        %685 = vmatpush2.msra.mxu0 0.0
        %686 = vmatprep.subr.mxu0 0.0
        %687 = vmatpush2.msra.mxu0 0.0
        %688 = vmatprep.subr.mxu0 0.0
        %689 = vmatpush2.msra.mxu0 0.0
        %690 = vmatprep.subr.mxu0 0.0
        %691 = vmatpush2.msra.mxu0 0.0
        %692 = vmatprep.mubr.f32.mxu0 0.0
        %v693 = vand.u32 %v204, 4294901760
        %694 = vmatmul.mubr.f32.gmra.mxu0 %v693
        %v695 = vpop.f32.mrf.mxu0
        %v696 = vadd.f32 %v594, %v695
        %v697 = vpop.f32.mrf.mxu0
        %v698 = vadd.f32 %v596, %v697
        %699 = vdwg.mxu0
        %700 = vmatprep.subr.mxu0 0.0
        %701 = vmatpush1.msra.mxu0 0.0
        %702 = vmatprep.subr.mxu0 0.0
        %703 = vmatpush1.msra.mxu0 0.0
        %704 = vmatprep.subr.mxu0 0.0
        %705 = vmatpush1.msra.mxu0 0.0
        %706 = vmatprep.subr.mxu0 0.0
        %707 = vmatpush1.msra.mxu0 0.0
        %708 = vmatprep.subr.mxu0 0.0
        %709 = vmatpush1.msra.mxu0 0.0
        %710 = vmatprep.subr.mxu0 0.0
        %711 = vmatpush1.msra.mxu0 0.0
        %712 = vmatprep.subr.mxu0 0.0
        %713 = vmatpush1.msra.mxu0 0.0
        %714 = vmatprep.subr.mxu0 0.0
        %715 = vmatpush1.msra.mxu0 0.0
        %716 = vmatprep.subr.mxu0 0.0
        %717 = vmatpush1.msra.mxu0 0.0
        %718 = vmatprep.subr.mxu0 0.0
        %719 = vmatpush1.msra.mxu0 0.0
        %720 = vmatprep.subr.mxu0 0.0
        %721 = vmatpush1.msra.mxu0 0.0
        %v722 = vand.u32 %v211, 4294901760
        %723 = vmatprep.subr.mxu0 %v722
        %v724 = vand.u32 %v208, 4294901760
        %725 = vmatpush1.msra.mxu0 %v724
        %v726 = vand.u32 %v199, 4294901760
        %727 = vmatprep.subr.mxu0 %v726
        %v728 = vand.u32 %v198, 4294901760
        %729 = vmatpush1.msra.mxu0 %v728
        %v730 = vand.u32 %v197, 4294901760
        %731 = vmatprep.subr.mxu0 %v730
        %v732 = vand.u32 %v196, 4294901760
        %733 = vmatpush1.msra.mxu0 %v732
        %v734 = vand.u32 %v195, 4294901760
        %735 = vmatprep.subr.mxu0 %v734
        %v736 = vand.u32 %v194, 4294901760
        %737 = vmatpush1.msra.mxu0 %v736
        %v738 = vand.u32 %v193, 4294901760
        %739 = vmatprep.subr.mxu0 %v738
        %v740 = vand.u32 %v192, 4294901760
        %741 = vmatpush1.msra.mxu0 %v740
        %742 = vmatprep.subr.mxu0 0.0
        %743 = vmatpush2.msra.mxu0 0.0
        %744 = vmatprep.subr.mxu0 0.0
        %745 = vmatpush2.msra.mxu0 0.0
        %746 = vmatprep.subr.mxu0 0.0
        %747 = vmatpush2.msra.mxu0 0.0
        %748 = vmatprep.subr.mxu0 0.0
        %749 = vmatpush2.msra.mxu0 0.0
        %750 = vmatprep.subr.mxu0 0.0
        %751 = vmatpush2.msra.mxu0 0.0
        %752 = vmatprep.subr.mxu0 0.0
        %753 = vmatpush2.msra.mxu0 0.0
        %754 = vmatprep.subr.mxu0 0.0
        %755 = vmatpush2.msra.mxu0 0.0
        %756 = vmatprep.subr.mxu0 0.0
        %757 = vmatpush2.msra.mxu0 0.0
        %758 = vmatprep.subr.mxu0 0.0
        %759 = vmatpush2.msra.mxu0 0.0
        %760 = vmatprep.subr.mxu0 0.0
        %761 = vmatpush2.msra.mxu0 0.0
        %762 = vmatprep.subr.mxu0 0.0
        %763 = vmatpush2.msra.mxu0 0.0
        %764 = vmatprep.subr.mxu0 0.0
        %765 = vmatpush2.msra.mxu0 0.0
        %766 = vmatprep.subr.mxu0 0.0
        %767 = vmatpush2.msra.mxu0 0.0
        %768 = vmatprep.subr.mxu0 0.0
        %769 = vmatpush2.msra.mxu0 0.0
        %770 = vmatprep.subr.mxu0 0.0
        %771 = vmatpush2.msra.mxu0 0.0
        %772 = vmatprep.subr.mxu0 0.0
        %773 = vmatpush2.msra.mxu0 0.0
        %774 = vmatprep.mubr.f32.mxu0 0.0
        %v775 = vand.u32 %v204, 4294901760
        %776 = vmatmul.mubr.f32.gmra.mxu0 %v775
        %v777 = vpop.f32.mrf.mxu0
        %v778 = vadd.f32 %v696, %v777
        %v779 = vpop.f32.mrf.mxu0
        %v780 = vadd.f32 %v698, %v779
        %781 = vdwg.mxu0
        %s782 = smul.u32 %s16, 2
        %s783 = smul.addr %s782, 8
        %s784 = scalar_lea.vmem [#allocation4], %s783
        %785 = vst [vmem:[%s784] sm:$0xff] %v778
        %786 = vst [vmem:[%s784 + $0x8] sm:$0xff] %v780
        %v787 = vld [vmem:[#allocation2] sm:$0xff]
        %v788 = vadd.f32 %v778, %v780
        %789 = vadd.xlane.f32.xlu0 %v788
        %v790 = vpop.xlane.xlu0 %789
        %v791 = vadd.f32 %v787, %v790
        %vm792 = vcmask 7168
        %793 = vst.msk [vmem:[#allocation2] sm:$0xff] %vm792, %v791
        %v794 = vld [vmem:[#allocation3] sm:$0xff]
        %v795 = vmul.f32 %v778, %v778
        %v796 = vmul.f32 %v780, %v780
        %v797 = vadd.f32 %v795, %v796
        %798 = vadd.xlane.f32.xlu0 %v797
        %v799 = vpop.xlane.xlu0 %798
        %v800 = vadd.f32 %v794, %v799
        %801 = vst.msk [vmem:[#allocation3] sm:$0xff] %vm792, %v800
        %p802 = scmp.eq.s32.totalorder %s16, 1
        // Predicated region
        $region41: #{tpu_custom_call.1} parent=35 // pred_check
          %p803 = pneg %p802
        $region42: #{tpu_custom_call.1} parent=35 // pred_check_branch
          %805 = sbr.rel (%p803) target = $region44
        $region43: #{tpu_custom_call.1} parent=35 // pred_region
          %v806 = vld [vmem:[#allocation2] sm:$0xff]
          %v807 = vmul.f32 %v806, 0.001953125
          %v808 = vld [vmem:[#allocation3] sm:$0xff]
          %v809 = vmul.f32 %v808, 0.001953125
          %v810 = vmul.f32 %v807, %v807
          %v811 = vsub.f32 %v809, %v810
          %v812 = vadd.f32 %v811, 1e-05
          %v813 = vrsqrt.pop %v812
          %v814 = vld [vmem:[%s2] sm:$0xff]
          %v815 = vmul.f32 %v814, %v813
          %v816 = vld [vmem:[%s3] sm:$0xff]
          %v817 = vmul.f32 %v807, %v815
          %v818 = vsub.f32 %v816, %v817
          %v819 = vld [vmem:[#allocation4] sm:$0xff]
          %v820 = vld [vmem:[#allocation4 + $0x8] sm:$0xff]
          %v821 = vld [vmem:[#allocation4 + $0x10] sm:$0xff]
          %v822 = vld [vmem:[#allocation4 + $0x18] sm:$0xff]
          %824 = vset.pattern.permute.xlu0 0
          %825 = vperm.xlu0 %824, %v815
          %v826 = vpop.permute.xlu0 %825
          %v828 = vmul.f32 %v819, %v826
          %v829 = vmul.f32 %v820, %v826
          %v830 = vmul.f32 %v821, %v826
          %v831 = vmul.f32 %v822, %v826
          %833 = vset.pattern.permute.xlu0 0
          %834 = vperm.xlu0 %833, %v818
          %v835 = vpop.permute.xlu0 %834
          %v837 = vadd.f32 %v828, %v835
          %v838 = vadd.f32 %v829, %v835
          %v839 = vadd.f32 %v830, %v835
          %v840 = vadd.f32 %v831, %v835
          %v841 = vsub.f32 0.0, %v837
          %v842 = vsub.f32 0.0, %v838
          %v843 = vsub.f32 0.0, %v839
          %v844 = vsub.f32 0.0, %v840
          %v845 = vmul.f32 %v841, 1.442695
          %v846 = vpow.pop %v845
          %v847 = vmul.f32 %v842, 1.442695
          %v848 = vpow.pop %v847
          %v849 = vmul.f32 %v843, 1.442695
          %v850 = vpow.pop %v849
          %v851 = vmul.f32 %v844, 1.442695
          %v852 = vpow.pop %v851
          %v853 = vadd.f32 %v846, 1.0
          %v854 = vadd.f32 %v848, 1.0
          %v855 = vadd.f32 %v850, 1.0
          %v856 = vadd.f32 %v852, 1.0
          %v857 = vrcp.pop %v853
          %v858 = vmul.f32 1.0, %v857
          %v859 = vrcp.pop %v854
          %v860 = vmul.f32 1.0, %v859
          %v861 = vrcp.pop %v855
          %v862 = vmul.f32 1.0, %v861
          %v863 = vrcp.pop %v856
          %v864 = vmul.f32 1.0, %v863
          %865 = vst [vmem:[#allocation4] sm:$0xff] %v858
          %866 = vst [vmem:[#allocation4 + $0x8] sm:$0xff] %v860
          %867 = vst [vmem:[#allocation4 + $0x10] sm:$0xff] %v862
          %868 = vst [vmem:[#allocation4 + $0x18] sm:$0xff] %v864
        $region44: #{tpu_custom_call.1} parent=35 // pred_fallthru
          _
        // Predicated region
        $region45: #{tpu_custom_call.1} parent=35 // pred_check
          %p869 = pneg %p118
        $region46: #{tpu_custom_call.1} parent=35 // pred_check_branch
          %871 = sbr.rel (%p869) target = $region48
        $region47: #{tpu_custom_call.1} parent=35 // pred_region
          %s873 = ssub.s32 512, 512
          %874 = vsyncadd [#allocation5], %s873
          %s875 = sshll.u32 [#allocation4], 4
          %s876 = int_to_ptr.vmem [resolvable:$true] %s875
          %881 = dma.vmem_to_hbm [thread:$0]  %s876, 512, %s4, [#allocation5], 256, 256, 16
        $region48: #{tpu_custom_call.1} parent=35 // pred_fallthru
          _
        // Predicated region
        $region49: #{tpu_custom_call.1} parent=35 // pred_check
          %p882 = pneg %p118
        $region50: #{tpu_custom_call.1} parent=35 // pred_check_branch
          %884 = sbr.rel (%p882) target = $region52
        $region51: #{tpu_custom_call.1} parent=35 // pred_region
          %885 = dma.done [#allocation5], 512
        $region52: #{tpu_custom_call.1} parent=35 // pred_fallthru
          _
      $region36: #{tpu_custom_call.1} parent=5 // pred_fallthru
        _
      %p886 = scmp.le.s32.totalorder 2, %s11
      // Predicated region
      $region53: #{tpu_custom_call.1} parent=5 // pred_check
        %p887 = pneg %p886
      $region54: #{tpu_custom_call.1} parent=5 // pred_check_branch
        %889 = sbr.rel (%p887) target = $region56
      $region55: #{tpu_custom_call.1} parent=5 // pred_region
        %s890 = ssub.s32 %s11, 2
      $region56: #{tpu_custom_call.1} parent=5 // pred_fallthru
        _
    $region6: #{tpu_custom_call.1} parent=1 // loop_footer
      %s15 = sadd.s32 1, %s11
    $region7: #{tpu_custom_call.1} parent=1 // loop_footer_branch
      %10 = sbr.rel target = $region3
    $region8: #{tpu_custom_call.1} parent=1 // loop_exit
      _
    %891 = vsyncpa [#allocation5], 1
    %s892 = scalar_lea.sflag [#allocation5], 1
    %893 = vsyncpa %s892, 1

</llo_original>
